<compile_context>
chip_gen: v7x
topology: tpu7x:2x2x1
jax: 0.10.0
libtpu: 0.0.40
codegen_flags: <defaults>
</compile_context>

<pallas_src>
import functools

import jax
import jax.numpy as jnp
from jax.experimental import pallas as pl
from jax.experimental.pallas import tpu as pltpu

_VMEM_LIMIT = 32 * 1024 * 1024   # safe scoped-VMEM budget on v5e/v6e/v7x
_NEG_INF = -1e30                 # finite mask value (keeps online softmax inf/nan free)


def _tile(dim, candidates):
    """Largest candidate tile that evenly divides `dim`, else the full dim."""
    for c in candidates:
        if dim >= c and dim % c == 0:
            return c
    return dim


# ------------------------------ tiled matmul kernel -------------------------------

def _matmul_kernel(x_ref, w_ref, o_ref, acc_ref):
    @pl.when(pl.program_id(2) == 0)
    def _init():
        acc_ref[...] = jnp.zeros(acc_ref.shape, jnp.float32)

    acc_ref[...] += jnp.dot(x_ref[...], w_ref[...],
                            preferred_element_type=jnp.float32)

    @pl.when(pl.program_id(2) == pl.num_programs(2) - 1)
    def _finalize():
        o_ref[...] = acc_ref[...].astype(o_ref.dtype)


def matmul(x, w):
    """x: (M, K), w: (K, N) -> (M, N). Tiled over (M, N, K) with fp32 accumulation."""
    M, K = x.shape
    K2, N = w.shape
    assert K == K2
    tm = _tile(M, (256, 128))
    tn = _tile(N, (256, 128))
    tk = _tile(K, (512, 256, 128))
    isz = jnp.dtype(x.dtype).itemsize
    cost = pl.CostEstimate(
        flops=2 * M * N * K,
        transcendentals=0,
        bytes_accessed=(M * K + K * N + M * N) * isz,
    )
    return pl.pallas_call(
        _matmul_kernel,
        out_shape=jax.ShapeDtypeStruct((M, N), x.dtype),
        grid=(M // tm, N // tn, K // tk),
        in_specs=[
            pl.BlockSpec((tm, tk), lambda i, j, k: (i, k)),
            pl.BlockSpec((tk, tn), lambda i, j, k: (k, j)),
        ],
        out_specs=pl.BlockSpec((tm, tn), lambda i, j, k: (i, j)),
        scratch_shapes=[pltpu.VMEM((tm, tn), jnp.float32)],
        compiler_params=pltpu.CompilerParams(
            dimension_semantics=("parallel", "parallel", "arbitrary"),
            vmem_limit_bytes=_VMEM_LIMIT,
        ),
        cost_estimate=cost,
    )(x, w)


# ---------------------------------- RoPE kernel ------------------------------------

def _rope_kernel(x_ref, cos_ref, sin_ref, o_ref, *, use_roll):
    x = x_ref[0, 0]                       # (ts, D)
    cos = cos_ref[...].astype(x.dtype)    # (ts, D)
    sin = sin_ref[...].astype(x.dtype)
    D = x.shape[-1]
    half = D // 2
    if use_roll:
        # rotate_half(x) == roll(x, half) * sign, sign = -1 on first half, +1 on second.
        sign = jnp.where(
            jax.lax.broadcasted_iota(jnp.int32, x.shape, 1) < half, -1.0, 1.0
        ).astype(x.dtype)
        x_rot = pltpu.roll(x, shift=half, axis=-1) * sign
    else:
        # Lane-sparse head_dim (e.g. the small test below): slice+concat path.
        x_rot = jnp.concatenate([-x[:, half:], x[:, :half]], axis=-1)
    o_ref[0, 0] = (x * cos + x_rot * sin).astype(o_ref.dtype)


def apply_rope(x, cos, sin):
    """x: (B, NH, S, D); cos/sin: (S, D) shared across batch & heads."""
    B, NH, S, D = x.shape
    ts = _tile(S, (256, 128))
    isz = jnp.dtype(x.dtype).itemsize
    kernel = functools.partial(_rope_kernel, use_roll=(D % 128 == 0))
    cost = pl.CostEstimate(
        flops=6 * x.size,
        transcendentals=0,
        bytes_accessed=2 * x.size * isz + 2 * S * D * 4,
    )
    return pl.pallas_call(
        kernel,
        out_shape=jax.ShapeDtypeStruct(x.shape, x.dtype),
        grid=(B, NH, S // ts),
        in_specs=[
            pl.BlockSpec((1, 1, ts, D), lambda b, h, si: (b, h, si, 0)),
            pl.BlockSpec((ts, D), lambda b, h, si: (si, 0)),
            pl.BlockSpec((ts, D), lambda b, h, si: (si, 0)),
        ],
        out_specs=pl.BlockSpec((1, 1, ts, D), lambda b, h, si: (b, h, si, 0)),
        compiler_params=pltpu.CompilerParams(
            dimension_semantics=("parallel", "parallel", "parallel"),
            vmem_limit_bytes=_VMEM_LIMIT,
        ),
        cost_estimate=cost,
    )(x, cos, sin)


# --------------------------- flash attention (online softmax) ----------------------

def _flash_attn_kernel(q_ref, k_ref, v_ref, o_ref, m_ref, l_ref, acc_ref,
                       *, scaling, causal, tq, tk):
    qi = pl.program_id(3)
    ki = pl.program_id(4)
    nk = pl.num_programs(4)

    @pl.when(ki == 0)
    def _init():
        m_ref[...] = jnp.full(m_ref.shape, _NEG_INF, jnp.float32)
        l_ref[...] = jnp.zeros(l_ref.shape, jnp.float32)
        acc_ref[...] = jnp.zeros(acc_ref.shape, jnp.float32)

    def _compute():
        q = q_ref[0, 0]          # (tq, D) in input dtype (bf16 inputs -> bf16 MXU)
        k = k_ref[0, 0]          # (tk, D)
        v = v_ref[0, 0]          # (tk, D)
        # QK^T on the MXU, fp32 accumulation.
        s = jax.lax.dot_general(
            q, k, (((1,), (1,)), ((), ())),
            preferred_element_type=jnp.float32) * scaling          # (tq, tk) f32
        if causal:
            qpos = qi * tq + jax.lax.broadcasted_iota(jnp.int32, (tq, tk), 0)
            kpos = ki * tk + jax.lax.broadcasted_iota(jnp.int32, (tq, tk), 1)
            s = jnp.where(kpos <= qpos, s, _NEG_INF)
        m_prev = m_ref[...]                                        # (tq, 1)
        m_new = jnp.maximum(m_prev, jnp.max(s, axis=-1, keepdims=True))
        alpha = jnp.exp(m_prev - m_new)
        p = jnp.exp(s - m_new)                                     # fp32 softmax numerator
        l_ref[...] = alpha * l_ref[...] + jnp.sum(p, axis=-1, keepdims=True)
        acc_ref[...] = alpha * acc_ref[...] + jnp.dot(
            p.astype(v.dtype), v, preferred_element_type=jnp.float32)
        m_ref[...] = m_new

    if causal:
        # Skip fully-masked (q, kv) tiles: needed iff kv tile start <= q tile end.
        pl.when(ki * tk <= qi * tq + (tq - 1))(_compute)
    else:
        _compute()

    @pl.when(ki == nk - 1)
    def _finalize():
        # pl.reciprocal(approx=True) is the perf choice when tolerance allows;
        # exact reciprocal kept here to preserve tight numerical agreement.
        inv_l = pl.reciprocal(l_ref[...], approx=False)
        o_ref[0, 0] = (acc_ref[...] * inv_l).astype(o_ref.dtype)


def flash_attention(q, k, v, *, n_rep, scaling, causal=True):
    """
    q:   (B, H,  S, D)
    k,v: (B, KH, S, D) with H = KH * n_rep (GQA, never materialized)
    returns (B, H, S, D)
    """
    B, H, S, D = q.shape
    _, KH, _, _ = k.shape
    assert H == KH * n_rep
    tq = _tile(S, (256, 128))
    tk = _tile(S, (256, 128))
    isz = jnp.dtype(q.dtype).itemsize
    kernel = functools.partial(_flash_attn_kernel, scaling=scaling,
                               causal=causal, tq=tq, tk=tk)
    cost = pl.CostEstimate(
        flops=4 * B * H * S * S * D,
        transcendentals=B * H * S * S,
        bytes_accessed=(2 * q.size + k.size + v.size) * isz,
    )
    # Grid ordered (B, KH, n_rep, q_blocks, kv_blocks): the n_rep query heads of one KV
    # head are adjacent so K/V blocks stay resident across the GQA group; kv axis last
    # and "arbitrary" (online-softmax reduction).
    return pl.pallas_call(
        kernel,
        out_shape=jax.ShapeDtypeStruct((B, H, S, D), q.dtype),
        grid=(B, KH, n_rep, S // tq, S // tk),
        in_specs=[
            pl.BlockSpec((1, 1, tq, D),
                         lambda b, g, r, qi, ki: (b, g * n_rep + r, qi, 0)),
            pl.BlockSpec((1, 1, tk, D),
                         lambda b, g, r, qi, ki: (b, g, ki, 0)),
            pl.BlockSpec((1, 1, tk, D),
                         lambda b, g, r, qi, ki: (b, g, ki, 0)),
        ],
        out_specs=pl.BlockSpec((1, 1, tq, D),
                               lambda b, g, r, qi, ki: (b, g * n_rep + r, qi, 0)),
        scratch_shapes=[
            pltpu.VMEM((tq, 1), jnp.float32),   # running max m
            pltpu.VMEM((tq, 1), jnp.float32),   # running denom l
            pltpu.VMEM((tq, D), jnp.float32),   # output accumulator
        ],
        compiler_params=pltpu.CompilerParams(
            dimension_semantics=("parallel", "parallel", "parallel",
                                 "parallel", "arbitrary"),
            vmem_limit_bytes=_VMEM_LIMIT,
        ),
        cost_estimate=cost,
    )(q, k, v)


# -------------------------------------- module -------------------------------------

class AttentionPallas:
    def __init__(self, hidden_size, num_heads, num_kv_heads, key, dtype=jnp.float32):
        self.hidden_size = hidden_size
        self.num_heads = num_heads
        self.num_kv_heads = num_kv_heads
        self.head_dim = hidden_size // num_heads
        self.n_rep = num_heads // num_kv_heads
        self.scaling = self.head_dim ** (-0.5)

        k1, k2, k3, k4 = jax.random.split(key, 4)
        init = lambda k, shp: (jax.random.normal(k, shp, jnp.float32) * 0.02).astype(dtype)
        # stored as (in_features, out_features) = W.T w.r.t. nn.Linear, bias=False
        self.wq = init(k1, (hidden_size, num_heads * self.head_dim))
        self.wk = init(k2, (hidden_size, num_kv_heads * self.head_dim))
        self.wv = init(k3, (hidden_size, num_kv_heads * self.head_dim))
        self.wo = init(k4, (num_heads * self.head_dim, hidden_size))
        # Fused Q|K|V weight so the activation is read from HBM once.
        self.w_qkv = jnp.concatenate([self.wq, self.wk, self.wv], axis=1)

    def rotary(self, S):
        # Llama rotary embedding, base 10000; kept at (S, D) — no batch broadcast.
        D = self.head_dim
        inv_freq = 1.0 / (10000.0 ** (jnp.arange(0, D, 2, dtype=jnp.float32) / D))
        pos = jnp.arange(S, dtype=jnp.float32)
        freqs = jnp.outer(pos, inv_freq)                # (S, D/2)
        emb = jnp.concatenate([freqs, freqs], axis=-1)  # (S, D)
        return jnp.cos(emb), jnp.sin(emb)

    def __call__(self, hidden_states, is_causal=True):
        B, S, Hm = hidden_states.shape
        D, H, KH = self.head_dim, self.num_heads, self.num_kv_heads

        x2d = hidden_states.reshape(B * S, Hm)
        qkv = matmul(x2d, self.w_qkv)                       # fused projection
        q = qkv[:, : H * D].reshape(B, S, H, D).transpose(0, 2, 1, 3)
        k = qkv[:, H * D:(H + KH) * D].reshape(B, S, KH, D).transpose(0, 2, 1, 3)
        v = qkv[:, (H + KH) * D:].reshape(B, S, KH, D).transpose(0, 2, 1, 3)

        cos, sin = self.rotary(S)
        q = apply_rope(q, cos, sin)          # RoPE once for Q
        k = apply_rope(k, cos, sin)          # RoPE once per KV head (not n_rep times)

        # TODO(synk): for head_dim < 128, pack each GQA head group into a lane-dense
        # (tq, n_rep*head_dim) slab to avoid masked vst partial stores; kept per-head
        # (full-extent D) blocks here for clarity.
        o = flash_attention(q, k, v, n_rep=self.n_rep,
                            scaling=self.scaling, causal=is_causal)

        o2d = o.transpose(0, 2, 1, 3).reshape(B * S, H * D)
        return matmul(o2d, self.wo).reshape(B, S, Hm)


# ----------------------------- pure-JAX reference check ----------------------------

def reference_forward(mod: AttentionPallas, x, is_causal=True):
    B, S, Hm = x.shape
    D, H, KH = mod.head_dim, mod.num_heads, mod.num_kv_heads
    hp = functools.partial(jnp.matmul, precision="highest")
    x2d = x.reshape(B * S, Hm)
    q = hp(x2d, mod.wq).reshape(B, S, H, D).transpose(0, 2, 1, 3)
    k = hp(x2d, mod.wk).reshape(B, S, KH, D).transpose(0, 2, 1, 3)
    v = hp(x2d, mod.wv).reshape(B, S, KH, D).transpose(0, 2, 1, 3)
    cos, sin = mod.rotary(S)
    cos4, sin4 = cos[None, None], sin[None, None]

    def rot_half(t):
        h = t.shape[-1] // 2
        return jnp.concatenate([-t[..., h:], t[..., :h]], axis=-1)

    q = q * cos4 + rot_half(q) * sin4
    k = k * cos4 + rot_half(k) * sin4
    k = jnp.repeat(k, mod.n_rep, axis=1)
    v = jnp.repeat(v, mod.n_rep, axis=1)
    s = jnp.einsum("bhqd,bhkd->bhqk", q, k, precision="highest") * mod.scaling
    if is_causal:
        mask = jnp.tril(jnp.ones((S, S), bool))
        s = jnp.where(mask, s, _NEG_INF)
    w = jax.nn.softmax(s.astype(jnp.float32), axis=-1).astype(q.dtype)
    o = jnp.einsum("bhqk,bhkd->bhqd", w, v, precision="highest")
    o2d = o.transpose(0, 2, 1, 3).reshape(B * S, H * D)
    return hp(o2d, mod.wo).reshape(B, S, Hm)


# ------------------------------------- main ----------------------------------------

if __name__ == "__main__":
    key = jax.random.PRNGKey(0)
    k_param, k_x = jax.random.split(key)

    B, S, HIDDEN = 2, 8, 32
    NUM_HEADS, NUM_KV_HEADS = 4, 2          # GQA: n_rep = 2, head_dim = 8

    mod = AttentionPallas(HIDDEN, NUM_HEADS, NUM_KV_HEADS, k_param)
    x = jax.random.normal(k_x, (B, S, HIDDEN), jnp.float32)

    out = jax.block_until_ready(mod(x, is_causal=True))
    ref = reference_forward(mod, x, is_causal=True)
    assert out.shape == (B, S, HIDDEN)
    err = float(jnp.max(jnp.abs(out - ref)))
    assert jnp.allclose(out, ref, rtol=2e-4, atol=2e-5), f"causal mismatch, max err {err:e}"

    out_nc = jax.block_until_ready(mod(x, is_causal=False))
    ref_nc = reference_forward(mod, x, is_causal=False)
    err_nc = float(jnp.max(jnp.abs(out_nc - ref_nc)))
    assert jnp.allclose(out_nc, ref_nc, rtol=2e-4, atol=2e-5), (
        f"non-causal mismatch, max err {err_nc:e}")

    print("KERNEL_OK")
</pallas_src>

<mosaic_0001>
module attributes {stable_mosaic.version = 11 : i64} {
  func.func @_matmul_kernel(%arg0: i32, %arg1: i32, %arg2: i32, %arg3: memref<16x32xf32, #tpu.memory_space<vmem>>, %arg4: memref<32x64xf32, #tpu.memory_space<vmem>>, %arg5: memref<16x64xf32, #tpu.memory_space<vmem>>, %arg6: memref<16x64xf32, #tpu.memory_space<vmem>>) attributes {dimension_semantics = [#tpu.dimension_semantics<parallel>, #tpu.dimension_semantics<parallel>, #tpu.dimension_semantics<arbitrary>], iteration_bounds = array<i64: 1, 1, 1>, scalar_prefetch = 0 : i64, scratch_operands = 1 : i64, tpu.core_type = #tpu.core_type<tc>, window_params = [{transform_indices = @transform_0, window_bounds = array<i64: 16, 32>}, {transform_indices = @transform_1, window_bounds = array<i64: 32, 64>}, {transform_indices = @transform_2, window_bounds = array<i64: 16, 64>}]} {
    %c0_i32 = arith.constant 0 : i32
    %0 = arith.cmpi eq, %arg2, %c0_i32 : i32
    %1 = arith.extui %0 : i1 to i32
    %c0_i32_0 = arith.constant 0 : i32
    %2 = arith.cmpi ne, %1, %c0_i32_0 : i32
    scf.if %2 {
      %cst_10 = arith.constant 0.000000e+00 : f32
      %12 = vector.broadcast %cst_10 : f32 to vector<16x64xf32>
      %c0_11 = arith.constant 0 : index
      %c0_12 = arith.constant 0 : index
      %13 = vector.load %arg6[%c0_11, %c0_12] : memref<16x64xf32, #tpu.memory_space<vmem>>, vector<16x64xf32>
      tpu.vector_store %arg6[%c0_11, %c0_12], %12 {strides = array<i32>} : memref<16x64xf32, #tpu.memory_space<vmem>>, vector<16x64xf32>,
    } else {
    }
    %c0 = arith.constant 0 : index
    %c0_1 = arith.constant 0 : index
    %3 = vector.load %arg6[%c0, %c0_1] : memref<16x64xf32, #tpu.memory_space<vmem>>, vector<16x64xf32>
    %c0_2 = arith.constant 0 : index
    %c0_3 = arith.constant 0 : index
    %4 = vector.load %arg3[%c0_2, %c0_3] : memref<16x32xf32, #tpu.memory_space<vmem>>, vector<16x32xf32>
    %c0_4 = arith.constant 0 : index
    %c0_5 = arith.constant 0 : index
    %5 = vector.load %arg4[%c0_4, %c0_5] : memref<32x64xf32, #tpu.memory_space<vmem>>, vector<32x64xf32>
    %cst = arith.constant dense<0.000000e+00> : vector<16x64xf32>
    %6 = tpu.matmul %4, %5, %cst {dimension_numbers = #tpu.dot_dimension_numbers<[1], [0], [0], [1], [0, 0, 1, 1], [], []>} : vector<16x32xf32>, vector<32x64xf32>, vector<16x64xf32> -> vector<16x64xf32>
    %7 = arith.addf %3, %6 : vector<16x64xf32>
    %c0_6 = arith.constant 0 : index
    %c0_7 = arith.constant 0 : index
    %8 = vector.load %arg6[%c0_6, %c0_7] : memref<16x64xf32, #tpu.memory_space<vmem>>, vector<16x64xf32>
    tpu.vector_store %arg6[%c0_6, %c0_7], %7 {strides = array<i32>} : memref<16x64xf32, #tpu.memory_space<vmem>>, vector<16x64xf32>,
    %c0_i32_8 = arith.constant 0 : i32
    %9 = arith.cmpi eq, %arg2, %c0_i32_8 : i32
    %10 = arith.extui %9 : i1 to i32
    %c0_i32_9 = arith.constant 0 : i32
    %11 = arith.cmpi ne, %10, %c0_i32_9 : i32
    scf.if %11 {
      %c0_10 = arith.constant 0 : index
      %c0_11 = arith.constant 0 : index
      %12 = vector.load %arg6[%c0_10, %c0_11] : memref<16x64xf32, #tpu.memory_space<vmem>>, vector<16x64xf32>
      %c0_12 = arith.constant 0 : index
      %c0_13 = arith.constant 0 : index
      %13 = vector.load %arg5[%c0_12, %c0_13] : memref<16x64xf32, #tpu.memory_space<vmem>>, vector<16x64xf32>
      tpu.vector_store %arg5[%c0_12, %c0_13], %12 {strides = array<i32>} : memref<16x64xf32, #tpu.memory_space<vmem>>, vector<16x64xf32>,
    } else {
    }
    return
  }
  func.func @transform_0(%arg0: i32, %arg1: i32, %arg2: i32) -> (i32, i32) {
    %c0_i32 = arith.constant 0 : i32
    return %arg0, %arg2 : i32, i32
  }
  func.func @transform_1(%arg0: i32, %arg1: i32, %arg2: i32) -> (i32, i32) {
    %c0_i32 = arith.constant 0 : i32
    return %arg2, %arg1 : i32, i32
  }
  func.func @transform_2(%arg0: i32, %arg1: i32, %arg2: i32) -> (i32, i32) {
    %c0_i32 = arith.constant 0 : i32
    return %arg0, %arg1 : i32, i32
  }
}

</mosaic_0001>

<llo_original>
// kernel: tpu_custom_call.1
$region0: #{tpu_custom_call.1}
  #allocation0 [shape = 'u32[]', space=smem, size = 0x4, offset = 0x4, fixed_abs, tag = 'smem constant byte address 0x4 - core index']
  #allocation1 [shape = 'u32[144,128]{1,0:T(1,128)}', space=vmem, size = 0x12000, scoped, tag = 'internal scratch']
  #allocation2 [shape = 'f32[16,64]{1,0:T(8,128)}', space=vmem, size = 0x2000, scoped, tag = 'scratch operand']
  %s0 = inlined_call_operand.hbm [shape: f32[16,32], index: 0, kind: input, shape index: {}]
  %s1 = inlined_call_operand.hbm [shape: f32[32,64], index: 1, kind: input, shape index: {}]
  %s2 = inlined_call_operand.hbm [shape: f32[16,64], index: 2, kind: output, shape index: {}]
  %s3 = sld [smem:[#allocation0]]
  $region34: #{tpu_custom_call.1} parent=0
    _
  %s5 = ssub.s32 1, %s3
  %s6 = scalar_select 0, %s5, %s3
  $region1: #{tpu_custom_call.1} parent=0
    #allocation3 [shape = 'u8[8192]{0}', space=vmem, size = 0x2000, scoped, tag = 'input window, operand 0, single buffered']
    #allocation4 [shape = 's32[1]{0}', space=sflag, size = 0x4, scoped, tag = 'scoped memory for tpu_custom_call.1']
    #allocation5 [shape = 's32[1]{0}', space=sflag, size = 0x4, scoped, tag = 'scoped memory for tpu_custom_call.1']
    #allocation6 [shape = 'u8[16384]{0}', space=vmem, size = 0x4000, scoped, tag = 'input window, operand 1, single buffered']
    #allocation7 [shape = 's32[1]{0}', space=sflag, size = 0x4, scoped, tag = 'scoped memory for tpu_custom_call.1']
    #allocation8 [shape = 'u8[8192]{0}', space=vmem, size = 0x2000, scoped, tag = 'output window, operand 0, single buffered']
    %7 = vsyncpa [#allocation4], 0
    %8 = vsyncpa [#allocation7], 0
    %9 = vsyncpa [#allocation5], 0
    // Predicated region
    $region2: #{tpu_custom_call.1} parent=1 // pred_check
      _
    $region3: #{tpu_custom_call.1} parent=1 // pred_check_branch
      %11 = sbr.rel (0) target = $region5
    $region4: #{tpu_custom_call.1} parent=1 // pred_region
      %s13 = ssub.s32 256, 256
      %14 = vsyncadd [#allocation4], %s13
      %s15 = sshll.u32 [#allocation3], 4
      %s16 = int_to_ptr.vmem [resolvable:$true] %s15
      %21 = dma.hbm_to_vmem [thread:$0]  %s0, 256, %s16, [#allocation4], 128, 128, 8
    $region5: #{tpu_custom_call.1} parent=1 // pred_fallthru
      _
    // Predicated region
    $region6: #{tpu_custom_call.1} parent=1 // pred_check
      _
    $region7: #{tpu_custom_call.1} parent=1 // pred_check_branch
      %23 = sbr.rel (0) target = $region9
    $region8: #{tpu_custom_call.1} parent=1 // pred_region
      %s25 = ssub.s32 512, 512
      %26 = vsyncadd [#allocation7], %s25
      %s27 = sshll.u32 [#allocation6], 4
      %s28 = int_to_ptr.vmem [resolvable:$true] %s27
      %33 = dma.hbm_to_vmem [thread:$0]  %s1, 512, %s28, [#allocation7], 128, 128, 8
    $region9: #{tpu_custom_call.1} parent=1 // pred_fallthru
      _
    // Predicated region
    $region10: #{tpu_custom_call.1} parent=1 // pred_check
      _
    $region11: #{tpu_custom_call.1} parent=1 // pred_check_branch
      %35 = sbr.rel (0) target = $region13
    $region12: #{tpu_custom_call.1} parent=1 // pred_region
      %36 = dma.done [#allocation4], 256
    $region13: #{tpu_custom_call.1} parent=1 // pred_fallthru
      _
    // Predicated region
    $region14: #{tpu_custom_call.1} parent=1 // pred_check
      _
    $region15: #{tpu_custom_call.1} parent=1 // pred_check_branch
      %38 = sbr.rel (0) target = $region17
    $region16: #{tpu_custom_call.1} parent=1 // pred_region
      %39 = dma.done [#allocation7], 512
    $region17: #{tpu_custom_call.1} parent=1 // pred_fallthru
      _
    %p40 = scmp.eq.s32.totalorder 0, 0
    // Predicated region
    $region18: #{tpu_custom_call.1} parent=1 // pred_check
      %p41 = pneg %p40
    $region19: #{tpu_custom_call.1} parent=1 // pred_check_branch
      %43 = sbr.rel (%p41) target = $region21
    $region20: #{tpu_custom_call.1} parent=1 // pred_region
      %vm44 = vcmask 523264
      %45 = vst.msk [vmem:[#allocation2] sm:$0xff] %vm44, 0.0
      %46 = vst.msk [vmem:[#allocation2 + $0x8] sm:$0xff] %vm44, 0.0
    $region21: #{tpu_custom_call.1} parent=1 // pred_fallthru
      _
    %v47 = vld [vmem:[#allocation2] sm:$0xff]
    %v48 = vld [vmem:[#allocation2 + $0x8] sm:$0xff]
    %v49 = vld [vmem:[#allocation3] sm:$0xff]
    %v50 = vld [vmem:[#allocation3 + $0x8] sm:$0xff]
    %v51 = vld [vmem:[#allocation6] sm:$0xff]
    %v52 = vld [vmem:[#allocation6 + $0x8] sm:$0xff]
    %v53 = vld [vmem:[#allocation6 + $0x10] sm:$0xff]
    %v54 = vld [vmem:[#allocation6 + $0x18] sm:$0xff]
    %vm55 = vcmask 261120
    %v57 = vsel %vm55, %v49, 0
    %v60 = vsel %vm55, %v50, 0
    %62 = vmatprep.subr.mxu0 0.0
    %63 = vmatpush1.msra.mxu0 %v51
    %64 = vmatprep.subr.mxu0 0.0
    %65 = vmatpush1.msra.mxu0 %v52
    %66 = vmatprep.subr.mxu0 0.0
    %67 = vmatpush1.msra.mxu0 %v53
    %68 = vmatprep.subr.mxu0 0.0
    %69 = vmatpush1.msra.mxu0 %v54
    %70 = vmatprep.subr.mxu0 0.0
    %71 = vmatpush1.msra.mxu0 0.0
    %72 = vmatprep.subr.mxu0 0.0
    %73 = vmatpush1.msra.mxu0 0.0
    %74 = vmatprep.subr.mxu0 0.0
    %75 = vmatpush1.msra.mxu0 0.0
    %76 = vmatprep.subr.mxu0 0.0
    %77 = vmatpush1.msra.mxu0 0.0
    %78 = vmatprep.subr.mxu0 0.0
    %79 = vmatpush1.msra.mxu0 0.0
    %80 = vmatprep.subr.mxu0 0.0
    %81 = vmatpush1.msra.mxu0 0.0
    %82 = vmatprep.subr.mxu0 0.0
    %83 = vmatpush1.msra.mxu0 0.0
    %84 = vmatprep.subr.mxu0 0.0
    %85 = vmatpush1.msra.mxu0 0.0
    %86 = vmatprep.subr.mxu0 0.0
    %87 = vmatpush1.msra.mxu0 0.0
    %88 = vmatprep.subr.mxu0 0.0
    %89 = vmatpush1.msra.mxu0 0.0
    %90 = vmatprep.subr.mxu0 0.0
    %91 = vmatpush1.msra.mxu0 0.0
    %92 = vmatprep.subr.mxu0 0.0
    %93 = vmatpush1.msra.mxu0 0.0
    %94 = vmatprep.subr.mxu0 0.0
    %95 = vmatpush1.msra.mxu0 0.0
    %96 = vmatprep.subr.mxu0 0.0
    %97 = vmatpush1.msra.mxu0 0.0
    %98 = vmatprep.subr.mxu0 0.0
    %99 = vmatpush1.msra.mxu0 0.0
    %100 = vmatprep.subr.mxu0 0.0
    %101 = vmatpush1.msra.mxu0 0.0
    %102 = vmatprep.subr.mxu0 0.0
    %103 = vmatpush1.msra.mxu0 0.0
    %104 = vmatprep.subr.mxu0 0.0
    %105 = vmatpush1.msra.mxu0 0.0
    %106 = vmatprep.subr.mxu0 0.0
    %107 = vmatpush1.msra.mxu0 0.0
    %108 = vmatprep.subr.mxu0 0.0
    %109 = vmatpush1.msra.mxu0 0.0
    %110 = vmatprep.subr.mxu0 0.0
    %111 = vmatpush1.msra.mxu0 0.0
    %112 = vmatprep.subr.mxu0 0.0
    %113 = vmatpush1.msra.mxu0 0.0
    %114 = vmatprep.subr.mxu0 0.0
    %115 = vmatpush1.msra.mxu0 0.0
    %116 = vmatprep.subr.mxu0 0.0
    %117 = vmatpush1.msra.mxu0 0.0
    %118 = vmatprep.subr.mxu0 0.0
    %119 = vmatpush1.msra.mxu0 0.0
    %120 = vmatprep.subr.mxu0 0.0
    %121 = vmatpush1.msra.mxu0 0.0
    %122 = vmatprep.subr.mxu0 0.0
    %123 = vmatpush1.msra.mxu0 0.0
    %124 = vmatprep.subr.mxu0 0.0
    %125 = vmatpush1.msra.mxu0 0.0
    %126 = vmatprep.mubr.f32.mxu0 0.0
    %127 = vmatmul.mubr.f32.gmra.mrb[0].mxu0 %v57
    %v128 = vpop.f32.mrb[0].mxu0
    %v129 = vadd.f32 0.0, %v128
    %v130 = vpop.f32.mrb[0].mxu0
    %131 = vmatprep.mubr.f32.mxu0 0.0
    %132 = vmatmul.mubr.f32.gmra.mrb[0].mxu0 %v60
    %v133 = vpop.f32.mrb[0].mxu0
    %v134 = vadd.f32 0.0, %v133
    %v135 = vpop.f32.mrb[0].mxu0
    %136 = vdwg.mxu0
    %v137 = vadd.f32 %v47, %v129
    %v138 = vadd.f32 %v48, %v134
    %vm139 = vcmask 523264
    %140 = vst.msk [vmem:[#allocation2] sm:$0xff] %vm139, %v137
    %141 = vst.msk [vmem:[#allocation2 + $0x8] sm:$0xff] %vm139, %v138
    // Predicated region
    $region22: #{tpu_custom_call.1} parent=1 // pred_check
      %p142 = pneg %p40
    $region23: #{tpu_custom_call.1} parent=1 // pred_check_branch
      %144 = sbr.rel (%p142) target = $region25
    $region24: #{tpu_custom_call.1} parent=1 // pred_region
      %v145 = vld [vmem:[#allocation2] sm:$0xff]
      %v146 = vld [vmem:[#allocation2 + $0x8] sm:$0xff]
      %147 = vst.msk [vmem:[#allocation8] sm:$0xff] %vm139, %v145
      %148 = vst.msk [vmem:[#allocation8 + $0x8] sm:$0xff] %vm139, %v146
    $region25: #{tpu_custom_call.1} parent=1 // pred_fallthru
      _
    // Predicated region
    $region26: #{tpu_custom_call.1} parent=1 // pred_check
      _
    $region27: #{tpu_custom_call.1} parent=1 // pred_check_branch
      %150 = sbr.rel (0) target = $region29
    $region28: #{tpu_custom_call.1} parent=1 // pred_region
      %s152 = ssub.s32 256, 256
      %153 = vsyncadd [#allocation5], %s152
      %s154 = sshll.u32 [#allocation8], 4
      %s155 = int_to_ptr.vmem [resolvable:$true] %s154
      %160 = dma.vmem_to_hbm [thread:$0]  %s155, 256, %s2, [#allocation5], 128, 128, 8
    $region29: #{tpu_custom_call.1} parent=1 // pred_fallthru
      _
    // Predicated region
    $region30: #{tpu_custom_call.1} parent=1 // pred_check
      _
    $region31: #{tpu_custom_call.1} parent=1 // pred_check_branch
      %162 = sbr.rel (0) target = $region33
    $region32: #{tpu_custom_call.1} parent=1 // pred_region
      %163 = dma.done [#allocation5], 256
    $region33: #{tpu_custom_call.1} parent=1 // pred_fallthru
      _
    %164 = vsyncpa [#allocation4], 1
    %165 = vsyncpa [#allocation7], 1
    %166 = vsyncpa [#allocation5], 1

</llo_original>
